<compile_context>
chip_gen: v7x
topology: tpu7x:2x2x1
jax: 0.10.0
libtpu: 0.0.40
codegen_flags: <defaults>
</compile_context>

<pallas_src>
import functools

import jax
import jax.numpy as jnp
from jax.experimental import pallas as pl
from jax.experimental.pallas import tpu as pltpu


# ---------------------------------------------------------------------------
# Kernels
# ---------------------------------------------------------------------------
def _linear_kernel_f32out(x_ref, w_ref, b_ref, o_ref):
    """f32-output variant: accumulate straight into the resident output tile."""
    k = pl.program_id(2)

    @pl.when(k == 0)
    def _init():
        # Seed the output tile with the bias exactly once (k == 0).
        o_ref[...] = jnp.broadcast_to(b_ref[...], o_ref.shape)

    # x tile [tm, tk] @ w tile [tk, tn] -> [tm, tn] f32 MXU accumulate.
    o_ref[...] += jnp.dot(x_ref[...], w_ref[...],
                          preferred_element_type=jnp.float32)


def _linear_kernel_acc(x_ref, w_ref, b_ref, o_ref, acc_ref):
    """Generic-output-dtype variant: f32 VMEM scratch accumulator."""
    k = pl.program_id(2)

    @pl.when(k == 0)
    def _init():
        acc_ref[...] = jnp.zeros_like(acc_ref)

    acc_ref[...] += jnp.dot(x_ref[...], w_ref[...],
                            preferred_element_type=jnp.float32)

    @pl.when(k == pl.num_programs(2) - 1)
    def _finalize():
        # Bias added exactly once, in f32, then cast to the output dtype.
        o_ref[...] = (acc_ref[...] + b_ref[...]).astype(o_ref.dtype)


# ---------------------------------------------------------------------------
# Tiling helpers
# ---------------------------------------------------------------------------
def _round_up(x, m):
    return ((x + m - 1) // m) * m


def _choose_tiles(M, N, K, compute_itemsize):
    """Pick (tm, tn, tk) and padded dims.  Full-dim blocks when a dim fits."""
    # Caps sized against the smallest-VMEM generation (v7x, 64 MiB/TC): the
    # worst-case double-buffered footprint stays under ~20 MiB.
    tm_cap, tn_cap = 512, 512
    tk_cap = 1024 if compute_itemsize >= 4 else 2048

    # Asymmetric tiles: if M is small and N large, grow tn so x is re-streamed
    # fewer times (HBM reads ~ (N/tn)*|x| + (M/tm)*|W|); and vice versa.
    if M <= 256 and N >= 2048:
        tn_cap = 1024
    elif N <= 256 and M >= 2048:
        tm_cap = 1024

    # Full-dim blocks avoid any wrapper-side padding (legal per the
    # "block equals full array dim" exception); otherwise use aligned caps.
    tm = M if M <= tm_cap else tm_cap
    tn = N if N <= tn_cap else tn_cap
    tk = K if K <= tk_cap else tk_cap
    Mp, Np, Kp = _round_up(M, tm), _round_up(N, tn), _round_up(K, tk)

    # v7x has 2 TensorCores sharded over the 'parallel' axes: avoid a
    # degenerate (1, 1, k) grid for non-trivial problems.
    if (Mp // tm) * (Np // tn) == 1:
        if tn >= 256 and tn % 256 == 0:
            tn //= 2          # halves stay 128-aligned and divide Np
        elif tm >= 256 and tm % 16 == 0:
            tm //= 2          # halves stay sublane-aligned for f32/bf16
    return tm, tn, tk, Mp, Np, Kp


# ---------------------------------------------------------------------------
# Wrapper = _NestedEnc(nn.Linear(K, N)).forward
# ---------------------------------------------------------------------------
@functools.partial(jax.jit, static_argnames=("force_kernel", "compute_dtype"))
def nested_enc_forward(x, weight, bias, *, force_kernel=False,
                       compute_dtype=None):
    """Pallas equivalent of _NestedEnc(nn.Linear(K, N)).forward(x) = x @ W^T + b.

    Args:
      x:       [M, K] input.
      weight:  [N, K] PyTorch-layout Linear weight (out_features, in_features).
      bias:    [N]    Linear bias.
      force_kernel:  run the Pallas kernel even for tiny shapes.
      compute_dtype: optional MXU input dtype (e.g. "bfloat16"); accumulation
                     and bias epilogue stay in f32, output keeps x.dtype.
    Returns:
      [M, N] output, same dtype as x.
    """
    M, K = x.shape
    N, K2 = weight.shape
    assert K == K2, "weight in_features must match x feature dim"
    out_dtype = x.dtype

    # Tiny problems: launch + pad/slice overhead dominates; XLA's fused dot
    # is strictly faster on every generation.
    if (not force_kernel) and (M * N * K) < (128 * 128 * 128):
        y = jnp.dot(x, weight.T, preferred_element_type=jnp.float32)
        return (y + bias.astype(jnp.float32)).astype(out_dtype)

    cdt = jnp.dtype(compute_dtype) if compute_dtype is not None else jnp.dtype(x.dtype)
    cbytes = cdt.itemsize
    obytes = jnp.dtype(out_dtype).itemsize

    tm, tn, tk, Mp, Np, Kp = _choose_tiles(M, N, K, cbytes)

    # MXU-friendly RHS layout [K, N]: K on sublanes, N lane-dense.  Avoids any
    # per-tile transpose of the [N, K] weight inside the hot loop.  In a real
    # module this transpose (and any pad) would be hoisted to parameter init.
    xk = x.astype(cdt)
    wk = weight.astype(cdt).T                      # [K, N]
    bk = bias.astype(jnp.float32).reshape(1, N)    # keep bias 2-D for layout

    # Zero-pad only when a dim actually gets tiled (full-dim blocks need none).
    if Mp != M or Kp != K:
        xk = jnp.pad(xk, ((0, Mp - M), (0, Kp - K)))
    if Kp != K or Np != N:
        wk = jnp.pad(wk, ((0, Kp - K), (0, Np - N)))
    if Np != N:
        bk = jnp.pad(bk, ((0, 0), (0, Np - N)))

    grid = (Mp // tm, Np // tn, Kp // tk)

    f32_out = jnp.dtype(out_dtype) == jnp.dtype(jnp.float32)
    kernel = _linear_kernel_f32out if f32_out else _linear_kernel_acc
    scratch = [] if f32_out else [pltpu.VMEM((tm, tn), jnp.float32)]

    # Double-buffered VMEM footprint; clamp the scoped limit to [32, 64] MiB
    # (safe on all generations, incl. v7x's 64 MiB physical VMEM).
    vmem_need = (2 * (tm * tk + tk * tn) * cbytes
                 + 2 * tm * tn * obytes
                 + (0 if f32_out else tm * tn * 4)
                 + 2 * tn * 4)
    vmem_limit = int(min(64 * 1024 * 1024, max(32 * 1024 * 1024, 2 * vmem_need)))

    # Re-streaming-aware byte estimate: x is re-read once per N tile, W once
    # per M tile (K is the innermost reduction axis).
    cost = pl.CostEstimate(
        flops=2 * Mp * Np * Kp,
        transcendentals=0,
        bytes_accessed=(grid[1] * Mp * Kp + grid[0] * Kp * Np) * cbytes
                       + Mp * Np * obytes + Np * 4,
    )

    out = pl.pallas_call(
        kernel,
        out_shape=jax.ShapeDtypeStruct((Mp, Np), out_dtype),
        grid_spec=pltpu.PrefetchScalarGridSpec(
            num_scalar_prefetch=0,
            grid=grid,
            in_specs=[
                pl.BlockSpec((tm, tk), lambda i, j, k: (i, k)),   # x   [M, K]
                pl.BlockSpec((tk, tn), lambda i, j, k: (k, j)),   # W^T [K, N]
                pl.BlockSpec((1, tn), lambda i, j, k: (0, j)),    # bias
            ],
            out_specs=pl.BlockSpec((tm, tn), lambda i, j, k: (i, j)),
            scratch_shapes=scratch,
        ),
        compiler_params=pltpu.CompilerParams(
            dimension_semantics=("parallel", "parallel", "arbitrary"),
            vmem_limit_bytes=vmem_limit,
        ),
        cost_estimate=cost,
    )(xk, wk, bk)

    if Mp != M or Np != N:
        out = out[:M, :N]
    return out


# ---------------------------------------------------------------------------
# Demo / correctness checks
# ---------------------------------------------------------------------------
if __name__ == "__main__":
    key = jax.random.PRNGKey(0)
    kx, kw, kb = jax.random.split(key, 3)
    hp = jax.lax.Precision.HIGHEST  # accurate pure-JAX reference

    # 1) Small shapes consistent with the module: seq=8, hidden=32 -> out=32.
    M, K, N = 8, 32, 32
    x = jax.random.normal(kx, (M, K), dtype=jnp.float32)
    weight = jax.random.normal(kw, (N, K), dtype=jnp.float32) * 0.1
    bias = jax.random.normal(kb, (N,), dtype=jnp.float32) * 0.1

    out = nested_enc_forward(x, weight, bias, force_kernel=True)
    jax.block_until_ready(out)
    ref = jnp.dot(x, weight.T, precision=hp) + bias
    assert out.shape == (M, N)
    assert jnp.allclose(out, ref, atol=1e-5, rtol=1e-5)

    # 2) Moderate shape exercising the 2-block parallel grid (tn split).
    M2, K2, N2 = 256, 384, 512
    x2 = jax.random.normal(kx, (M2, K2), dtype=jnp.float32)
    w2 = jax.random.normal(kw, (N2, K2), dtype=jnp.float32) * 0.05
    b2 = jax.random.normal(kb, (N2,), dtype=jnp.float32) * 0.05
    out2 = nested_enc_forward(x2, w2, b2, force_kernel=True)
    jax.block_until_ready(out2)
    ref2 = jnp.dot(x2, w2.T, precision=hp) + b2
    assert jnp.allclose(out2, ref2, atol=1e-3, rtol=1e-3)

    # 3) K-tiled shape (2 reduction steps) exercising accumulate-into-output.
    M3, K3, N3 = 64, 2048, 256
    x3 = jax.random.normal(kx, (M3, K3), dtype=jnp.float32)
    w3 = jax.random.normal(kw, (N3, K3), dtype=jnp.float32) * 0.05
    b3 = jax.random.normal(kb, (N3,), dtype=jnp.float32) * 0.05
    out3 = nested_enc_forward(x3, w3, b3, force_kernel=True)
    jax.block_until_ready(out3)
    ref3 = jnp.dot(x3, w3.T, precision=hp) + b3
    assert jnp.allclose(out3, ref3, atol=1e-3, rtol=1e-3)

    # 4) Optional bf16 MXU path (f32 accumulation), loose tolerance.
    out4 = nested_enc_forward(x2, w2, b2, force_kernel=True,
                              compute_dtype="bfloat16")
    jax.block_until_ready(out4)
    assert jnp.allclose(out4, ref2, atol=3e-2, rtol=3e-2)

    print("KERNEL_OK")
</pallas_src>

<mosaic_0001>
module attributes {stable_mosaic.version = 11 : i64} {
  func.func @_linear_kernel_f32out(%arg0: i32, %arg1: i32, %arg2: i32, %arg3: memref<8x32xf32, #tpu.memory_space<vmem>>, %arg4: memref<32x32xf32, #tpu.memory_space<vmem>>, %arg5: memref<1x32xf32, #tpu.memory_space<vmem>>, %arg6: memref<8x32xf32, #tpu.memory_space<vmem>>) attributes {dimension_semantics = [#tpu.dimension_semantics<parallel>, #tpu.dimension_semantics<parallel>, #tpu.dimension_semantics<arbitrary>], iteration_bounds = array<i64: 1, 1, 1>, scalar_prefetch = 0 : i64, scratch_operands = 0 : i64, tpu.core_type = #tpu.core_type<tc>, window_params = [{transform_indices = @transform_0, window_bounds = array<i64: 8, 32>}, {transform_indices = @transform_1, window_bounds = array<i64: 32, 32>}, {transform_indices = @transform_2, window_bounds = array<i64: 1, 32>}, {transform_indices = @transform_3, window_bounds = array<i64: 8, 32>}]} {
    %c0_i32 = arith.constant 0 : i32
    %0 = arith.cmpi eq, %arg2, %c0_i32 : i32
    %1 = arith.extui %0 : i1 to i32
    %c0_i32_0 = arith.constant 0 : i32
    %2 = arith.cmpi ne, %1, %c0_i32_0 : i32
    scf.if %2 {
      %c0_8 = arith.constant 0 : index
      %c0_9 = arith.constant 0 : index
      %9 = vector.load %arg5[%c0_8, %c0_9] : memref<1x32xf32, #tpu.memory_space<vmem>>, vector<1x32xf32>
      %10 = vector.shape_cast %9 : vector<1x32xf32> to vector<1x32xf32>
      %11 = vector.broadcast %10 : vector<1x32xf32> to vector<8x32xf32>
      %c0_10 = arith.constant 0 : index
      %c0_11 = arith.constant 0 : index
      %12 = vector.load %arg6[%c0_10, %c0_11] : memref<8x32xf32, #tpu.memory_space<vmem>>, vector<8x32xf32>
      tpu.vector_store %arg6[%c0_10, %c0_11], %11 {strides = array<i32>} : memref<8x32xf32, #tpu.memory_space<vmem>>, vector<8x32xf32>,
    } else {
    }
    %c0 = arith.constant 0 : index
    %c0_1 = arith.constant 0 : index
    %3 = vector.load %arg6[%c0, %c0_1] : memref<8x32xf32, #tpu.memory_space<vmem>>, vector<8x32xf32>
    %c0_2 = arith.constant 0 : index
    %c0_3 = arith.constant 0 : index
    %4 = vector.load %arg3[%c0_2, %c0_3] : memref<8x32xf32, #tpu.memory_space<vmem>>, vector<8x32xf32>
    %c0_4 = arith.constant 0 : index
    %c0_5 = arith.constant 0 : index
    %5 = vector.load %arg4[%c0_4, %c0_5] : memref<32x32xf32, #tpu.memory_space<vmem>>, vector<32x32xf32>
    %cst = arith.constant dense<0.000000e+00> : vector<8x32xf32>
    %6 = tpu.matmul %4, %5, %cst {dimension_numbers = #tpu.dot_dimension_numbers<[1], [0], [0], [1], [0, 0, 1, 1], [], []>} : vector<8x32xf32>, vector<32x32xf32>, vector<8x32xf32> -> vector<8x32xf32>
    %7 = arith.addf %3, %6 : vector<8x32xf32>
    %c0_6 = arith.constant 0 : index
    %c0_7 = arith.constant 0 : index
    %8 = vector.load %arg6[%c0_6, %c0_7] : memref<8x32xf32, #tpu.memory_space<vmem>>, vector<8x32xf32>
    tpu.vector_store %arg6[%c0_6, %c0_7], %7 {strides = array<i32>} : memref<8x32xf32, #tpu.memory_space<vmem>>, vector<8x32xf32>,
    return
  }
  func.func @transform_0(%arg0: i32, %arg1: i32, %arg2: i32) -> (i32, i32) {
    %c0_i32 = arith.constant 0 : i32
    return %arg0, %arg2 : i32, i32
  }
  func.func @transform_1(%arg0: i32, %arg1: i32, %arg2: i32) -> (i32, i32) {
    %c0_i32 = arith.constant 0 : i32
    return %arg2, %arg1 : i32, i32
  }
  func.func @transform_2(%arg0: i32, %arg1: i32, %arg2: i32) -> (i32, i32) {
    %c0_i32 = arith.constant 0 : i32
    %c0_i32_0 = arith.constant 0 : i32
    return %c0_i32, %arg1 : i32, i32
  }
  func.func @transform_3(%arg0: i32, %arg1: i32, %arg2: i32) -> (i32, i32) {
    %c0_i32 = arith.constant 0 : i32
    return %arg0, %arg1 : i32, i32
  }
}

</mosaic_0001>

<llo_original>
// kernel: nested_enc_forward.1
$region0: #{nested_enc_forward.1}
  #allocation0 [shape = 'u32[]', space=smem, size = 0x4, offset = 0x4, fixed_abs, tag = 'smem constant byte address 0x4 - core index']
  #allocation1 [shape = 'u32[144,128]{1,0:T(1,128)}', space=vmem, size = 0x12000, scoped, tag = 'internal scratch']
  %s0 = inlined_call_operand.vmem [shape: f32[8,32], index: 0, kind: input, shape index: {}]
  %s1 = inlined_call_operand.vmem [shape: f32[32,32], index: 1, kind: input, shape index: {}]
  %s2 = inlined_call_operand.vmem [shape: f32[1,32], index: 2, kind: input, shape index: {}]
  %s3 = inlined_call_operand.hbm [shape: f32[8,32], index: 3, kind: output, shape index: {}]
  %s4 = sld [smem:[#allocation0]]
  $region26: #{nested_enc_forward.1} parent=0
    _
  %s6 = ssub.s32 1, %s4
  %s7 = scalar_select 0, %s6, %s4
  $region1: #{nested_enc_forward.1} parent=0
    #allocation2 [shape = 'u8[4096]{0}', space=vmem, size = 0x1000, scoped, tag = 'output window, operand 0, single buffered']
    #allocation3 [shape = 's32[1]{0}', space=sflag, size = 0x4, scoped, tag = 'scoped memory for nested_enc_forward.1']
    %8 = vsyncpa [#allocation3], 0
    // Predicated region
    $region2: #{nested_enc_forward.1} parent=1 // pred_check
      _
    $region3: #{nested_enc_forward.1} parent=1 // pred_check_branch
      %10 = sbr.rel (0) target = $region5
    $region4: #{nested_enc_forward.1} parent=1 // pred_region
      _
    $region5: #{nested_enc_forward.1} parent=1 // pred_fallthru
      _
    // Predicated region
    $region6: #{nested_enc_forward.1} parent=1 // pred_check
      _
    $region7: #{nested_enc_forward.1} parent=1 // pred_check_branch
      %12 = sbr.rel (0) target = $region9
    $region8: #{nested_enc_forward.1} parent=1 // pred_region
      _
    $region9: #{nested_enc_forward.1} parent=1 // pred_fallthru
      _
    // Predicated region
    $region10: #{nested_enc_forward.1} parent=1 // pred_check
      _
    $region11: #{nested_enc_forward.1} parent=1 // pred_check_branch
      %14 = sbr.rel (0) target = $region13
    $region12: #{nested_enc_forward.1} parent=1 // pred_region
      _
    $region13: #{nested_enc_forward.1} parent=1 // pred_fallthru
      _
    %p15 = scmp.eq.s32.totalorder 0, 0
    // Predicated region
    $region14: #{nested_enc_forward.1} parent=1 // pred_check
      %p16 = pneg %p15
    $region15: #{nested_enc_forward.1} parent=1 // pred_check_branch
      %18 = sbr.rel (%p16) target = $region17
    $region16: #{nested_enc_forward.1} parent=1 // pred_region
      %v19 = vld [vmem:[%s2] sm:$0x1]
      %v21 = vlaneseq
      %v22 = vshrl.u32 %v21, 7
      %v23 = vsub.s32 0, %v22
      %v24 = vrot.slane %v19, %v23
      %vm26 = vcmask 261120
      %27 = vst.msk [vmem:[#allocation2] sm:$0xff] %vm26, %v24
    $region17: #{nested_enc_forward.1} parent=1 // pred_fallthru
      _
    %v28 = vld [vmem:[#allocation2] sm:$0xff]
    %v29 = vld [vmem:[%s0] sm:$0xff]
    %v30 = vld [vmem:[%s1] sm:$0xff]
    %v31 = vld [vmem:[%s1 + $0x8] sm:$0xff]
    %v32 = vld [vmem:[%s1 + $0x10] sm:$0xff]
    %v33 = vld [vmem:[%s1 + $0x18] sm:$0xff]
    %vm34 = vcmask 261120
    %v36 = vsel %vm34, %v29, 0
    %38 = vmatprep.subr.mxu0 0.0
    %39 = vmatpush1.msra.mxu0 %v30
    %40 = vmatprep.subr.mxu0 0.0
    %41 = vmatpush1.msra.mxu0 %v31
    %42 = vmatprep.subr.mxu0 0.0
    %43 = vmatpush1.msra.mxu0 %v32
    %44 = vmatprep.subr.mxu0 0.0
    %45 = vmatpush1.msra.mxu0 %v33
    %46 = vmatprep.subr.mxu0 0.0
    %47 = vmatpush1.msra.mxu0 0.0
    %48 = vmatprep.subr.mxu0 0.0
    %49 = vmatpush1.msra.mxu0 0.0
    %50 = vmatprep.subr.mxu0 0.0
    %51 = vmatpush1.msra.mxu0 0.0
    %52 = vmatprep.subr.mxu0 0.0
    %53 = vmatpush1.msra.mxu0 0.0
    %54 = vmatprep.subr.mxu0 0.0
    %55 = vmatpush1.msra.mxu0 0.0
    %56 = vmatprep.subr.mxu0 0.0
    %57 = vmatpush1.msra.mxu0 0.0
    %58 = vmatprep.subr.mxu0 0.0
    %59 = vmatpush1.msra.mxu0 0.0
    %60 = vmatprep.subr.mxu0 0.0
    %61 = vmatpush1.msra.mxu0 0.0
    %62 = vmatprep.subr.mxu0 0.0
    %63 = vmatpush1.msra.mxu0 0.0
    %64 = vmatprep.subr.mxu0 0.0
    %65 = vmatpush1.msra.mxu0 0.0
    %66 = vmatprep.subr.mxu0 0.0
    %67 = vmatpush1.msra.mxu0 0.0
    %68 = vmatprep.subr.mxu0 0.0
    %69 = vmatpush1.msra.mxu0 0.0
    %70 = vmatprep.subr.mxu0 0.0
    %71 = vmatpush1.msra.mxu0 0.0
    %72 = vmatprep.subr.mxu0 0.0
    %73 = vmatpush1.msra.mxu0 0.0
    %74 = vmatprep.subr.mxu0 0.0
    %75 = vmatpush1.msra.mxu0 0.0
    %76 = vmatprep.subr.mxu0 0.0
    %77 = vmatpush1.msra.mxu0 0.0
    %78 = vmatprep.subr.mxu0 0.0
    %79 = vmatpush1.msra.mxu0 0.0
    %80 = vmatprep.subr.mxu0 0.0
    %81 = vmatpush1.msra.mxu0 0.0
    %82 = vmatprep.subr.mxu0 0.0
    %83 = vmatpush1.msra.mxu0 0.0
    %84 = vmatprep.subr.mxu0 0.0
    %85 = vmatpush1.msra.mxu0 0.0
    %86 = vmatprep.subr.mxu0 0.0
    %87 = vmatpush1.msra.mxu0 0.0
    %88 = vmatprep.subr.mxu0 0.0
    %89 = vmatpush1.msra.mxu0 0.0
    %90 = vmatprep.subr.mxu0 0.0
    %91 = vmatpush1.msra.mxu0 0.0
    %92 = vmatprep.subr.mxu0 0.0
    %93 = vmatpush1.msra.mxu0 0.0
    %94 = vmatprep.subr.mxu0 0.0
    %95 = vmatpush1.msra.mxu0 0.0
    %96 = vmatprep.subr.mxu0 0.0
    %97 = vmatpush1.msra.mxu0 0.0
    %98 = vmatprep.subr.mxu0 0.0
    %99 = vmatpush1.msra.mxu0 0.0
    %100 = vmatprep.subr.mxu0 0.0
    %101 = vmatpush1.msra.mxu0 0.0
    %102 = vmatprep.mubr.f32.mxu0 0.0
    %103 = vmatmul.mubr.f32.gmra.mrb[0].mxu0 %v36
    %v104 = vpop.f32.mrb[0].mxu0
    %v105 = vadd.f32 0.0, %v104
    %v106 = vpop.f32.mrb[0].mxu0
    %107 = vdwg.mxu0
    %v108 = vadd.f32 %v28, %v105
    %109 = vst.msk [vmem:[#allocation2] sm:$0xff] %vm34, %v108
    // Predicated region
    $region18: #{nested_enc_forward.1} parent=1 // pred_check
      _
    $region19: #{nested_enc_forward.1} parent=1 // pred_check_branch
      %111 = sbr.rel (0) target = $region21
    $region20: #{nested_enc_forward.1} parent=1 // pred_region
      %s113 = ssub.s32 128, 128
      %114 = vsyncadd [#allocation3], %s113
      %s116 = sshll.u32 [#allocation2], 4
      %s117 = int_to_ptr.vmem [resolvable:$true] %s116
      %119 = dma.vmem_to_hbm [thread:$0]  %s117, 128, %s3, [#allocation3]
    $region21: #{nested_enc_forward.1} parent=1 // pred_fallthru
      _
    // Predicated region
    $region22: #{nested_enc_forward.1} parent=1 // pred_check
      _
    $region23: #{nested_enc_forward.1} parent=1 // pred_check_branch
      %121 = sbr.rel (0) target = $region25
    $region24: #{nested_enc_forward.1} parent=1 // pred_region
      %122 = dma.done [#allocation3], 128
    $region25: #{nested_enc_forward.1} parent=1 // pred_fallthru
      _
    %123 = vsyncpa [#allocation3], 1

</llo_original>
